<compile_context>
chip_gen: v5e
topology: v5e:2x2
jax: 0.10.0
libtpu: 0.0.40
codegen_flags: <defaults>
</compile_context>

<pallas_src>
import functools

import jax
import jax.numpy as jnp
from jax.experimental import pallas as pl
from jax.experimental.pallas import tpu as pltpu


# ---------------------------------------------------------------------------
# Kernels
# ---------------------------------------------------------------------------
def _pe_add_kernel(x_ref, pe_ref, o_ref):
    """Inference path: out = x + pe (dropout is identity in eval mode)."""
    # x_ref: (tile_s, B*D), pe_ref: (1, B*D) -> broadcast over the seq tile.
    o_ref[...] = x_ref[...] + pe_ref[...]


def _pe_add_dropout_kernel(x_ref, seed_ref, pe_ref, o_ref, *, p, tile_s):
    """Training path: out = dropout(x + pe, p) using a stateless counter hash."""
    y = x_ref[...] + pe_ref[...]
    rows, cols = y.shape

    # Global element index (counter), independent of tiling / core assignment.
    row = jax.lax.broadcasted_iota(jnp.int32, (rows, cols), 0)
    col = jax.lax.broadcasted_iota(jnp.int32, (rows, cols), 1)
    grow = row + pl.program_id(0) * tile_s
    idx = (grow * cols + col).astype(jnp.uint32)

    # Mix with the seed, then murmur3 fmix32 finalizer -> uniform uint32.
    seed_u = seed_ref[0].astype(jnp.uint32)
    h = idx ^ (seed_u * jnp.uint32(0x9E3779B9))
    h = h ^ (h >> 16)
    h = h * jnp.uint32(0x85EBCA6B)
    h = h ^ (h >> 13)
    h = h * jnp.uint32(0xC2B2AE35)
    h = h ^ (h >> 16)

    # keep element iff uniform(0,1) >= p  <=>  h >= p * 2^32  (raw u32 compare)
    threshold = jnp.uint32(min(int(p * (2.0 ** 32)), 2 ** 32 - 1))
    keep = h >= threshold
    scale = jnp.asarray(1.0 / (1.0 - p), dtype=y.dtype)
    o_ref[...] = jnp.where(keep, y * scale, jnp.zeros_like(y))


# ---------------------------------------------------------------------------
# Wrapper
# ---------------------------------------------------------------------------
def _choose_tile_s(S, row_bytes, target_bytes=2 << 20):
    """Pick a seq-tile (~2 MiB per x block, multiple of 8 rows) for pipelining."""
    if S * row_bytes <= target_bytes:
        return S
    tile = max(8, ((target_bytes // row_bytes) // 8) * 8)
    return int(min(tile, S))


def learnable_positional_encoding(x, pe, *, dropout_p=0.1, training=False,
                                  seed=0, donate_x=False):
    """x: [S, B, D], pe: [max_len, D] with max_len in {B, 1}  ->  [S, B, D]."""
    S, B, D = x.shape
    assert pe.shape[-1] == D and pe.shape[0] in (1, B), (
        "PyTorch `x + self.pe` broadcast requires max_len == batch (or 1); "
        f"got pe{pe.shape} vs x{x.shape}"
    )

    BD = B * D
    itemsize = jnp.dtype(x.dtype).itemsize

    # Lane-dense layout: flatten (B, D) -> B*D so the last dim is a large
    # multiple of 128 even for small d_model (pure reshape, B and D adjacent).
    x2 = x.reshape(S, BD)
    pe_row = jnp.broadcast_to(pe, (B, D)).astype(x.dtype).reshape(1, BD)

    tile_s = _choose_tile_s(S, BD * itemsize)
    grid = (pl.cdiv(S, tile_s),)

    x_spec = pl.BlockSpec((tile_s, BD), lambda i: (i, 0))
    pe_spec = pl.BlockSpec((1, BD), lambda i: (0, 0))
    out_spec = pl.BlockSpec((tile_s, BD), lambda i: (i, 0))
    out_shape = jax.ShapeDtypeStruct((S, BD), x.dtype)

    cost = pl.CostEstimate(
        flops=S * BD,
        transcendentals=0,
        bytes_accessed=2 * S * BD * itemsize + BD * itemsize,
    )
    cparams = pltpu.CompilerParams(dimension_semantics=("parallel",))
    io_alias = {0: 0} if donate_x else {}

    if (not training) or dropout_p == 0.0:
        out2 = pl.pallas_call(
            _pe_add_kernel,
            out_shape=out_shape,
            grid_spec=pltpu.PrefetchScalarGridSpec(
                num_scalar_prefetch=0,
                grid=grid,
                in_specs=[x_spec, pe_spec],
                out_specs=out_spec,
            ),
            compiler_params=cparams,
            cost_estimate=cost,
            input_output_aliases=io_alias,
        )(x2, pe_row)
        return out2.reshape(S, B, D)

    seed_arr = jnp.asarray([seed], dtype=jnp.int32)
    kernel = functools.partial(
        _pe_add_dropout_kernel, p=float(dropout_p), tile_s=tile_s
    )
    out2 = pl.pallas_call(
        kernel,
        out_shape=out_shape,
        grid_spec=pltpu.PrefetchScalarGridSpec(
            num_scalar_prefetch=0,
            grid=grid,
            in_specs=[
                x_spec,
                pl.BlockSpec(memory_space=pltpu.MemorySpace.SMEM),  # seed
                pe_spec,
            ],
            out_specs=out_spec,
        ),
        compiler_params=cparams,
        cost_estimate=cost,
        input_output_aliases=io_alias,
    )(x2, seed_arr, pe_row)
    return out2.reshape(S, B, D)


# ---------------------------------------------------------------------------
# Demo / self-test
# ---------------------------------------------------------------------------
if __name__ == "__main__":
    # x = [seq, batch, d_model], pe = [max_len, d_model] with max_len == batch
    # (required by the module's `x + self.pe` broadcast; see note above).
    seq_len, batch, d_model = 8, 4, 32
    max_len = batch
    dropout_p = 0.1

    key = jax.random.PRNGKey(0)
    kx, kpe = jax.random.split(key)
    x = jax.random.normal(kx, (seq_len, batch, d_model), dtype=jnp.float32)
    pe = jax.random.uniform(
        kpe, (max_len, d_model), minval=-0.02, maxval=0.02, dtype=jnp.float32
    )

    ref = x + pe[None, :, :]

    # Eval-mode forward (dropout == identity), matching module.eval().
    out = learnable_positional_encoding(x, pe, dropout_p=dropout_p, training=False)
    out = jax.block_until_ready(out)
    assert out.shape == (seq_len, batch, d_model)
    assert jnp.allclose(out, ref, atol=1e-6), "eval-mode mismatch vs reference"

    # Training-mode path (in-kernel hash dropout).  Check scaling of kept
    # elements exactly and drop fraction loosely.
    out_train = learnable_positional_encoding(
        x, pe, dropout_p=dropout_p, training=True, seed=1234
    )
    out_train = jax.block_until_ready(out_train)
    scale = 1.0 / (1.0 - dropout_p)
    kept_ok = jnp.all(
        (out_train == 0) | (jnp.abs(out_train - ref * scale) <= 1e-5)
    )
    assert bool(kept_ok), "kept elements not scaled by 1/(1-p)"
    drop_frac = float(jnp.mean((out_train == 0).astype(jnp.float32)))
    assert 0.0 <= drop_frac <= 0.3, f"implausible drop fraction {drop_frac}"

    print("KERNEL_OK")
</pallas_src>

<mosaic_0001>
module attributes {stable_mosaic.version = 11 : i64} {
  func.func @_pe_add_kernel(%arg0: i32, %arg1: memref<8x128xf32, #tpu.memory_space<vmem>>, %arg2: memref<1x128xf32, #tpu.memory_space<vmem>>, %arg3: memref<8x128xf32, #tpu.memory_space<vmem>>) attributes {dimension_semantics = [#tpu.dimension_semantics<parallel>], iteration_bounds = array<i64: 1>, scalar_prefetch = 0 : i64, scratch_operands = 0 : i64, tpu.core_type = #tpu.core_type<tc>, window_params = [{transform_indices = @transform_0, window_bounds = array<i64: 8, 128>}, {pipeline_mode = #tpu.pipeline_mode<synchronous>, transform_indices = @transform_1, window_bounds = array<i64: 1, 128>}, {transform_indices = @transform_2, window_bounds = array<i64: 8, 128>}]} {
    %c0 = arith.constant 0 : index
    %c0_0 = arith.constant 0 : index
    %0 = vector.load %arg1[%c0, %c0_0] : memref<8x128xf32, #tpu.memory_space<vmem>>, vector<8x128xf32>
    %c0_1 = arith.constant 0 : index
    %c0_2 = arith.constant 0 : index
    %1 = vector.load %arg2[%c0_1, %c0_2] : memref<1x128xf32, #tpu.memory_space<vmem>>, vector<1x128xf32>
    %2 = vector.broadcast %1 : vector<1x128xf32> to vector<8x128xf32>
    %3 = arith.addf %0, %2 : vector<8x128xf32>
    %c0_3 = arith.constant 0 : index
    %c0_4 = arith.constant 0 : index
    %4 = vector.load %arg3[%c0_3, %c0_4] : memref<8x128xf32, #tpu.memory_space<vmem>>, vector<8x128xf32>
    tpu.vector_store %arg3[%c0_3, %c0_4], %3 {strides = array<i32>} : memref<8x128xf32, #tpu.memory_space<vmem>>, vector<8x128xf32>,
    return
  }
  func.func @transform_0(%arg0: i32) -> (i32, i32) {
    %c0_i32 = arith.constant 0 : i32
    %c0_i32_0 = arith.constant 0 : i32
    return %arg0, %c0_i32 : i32, i32
  }
  func.func @transform_1(%arg0: i32) -> (i32, i32) {
    %c0_i32 = arith.constant 0 : i32
    %c0_i32_0 = arith.constant 0 : i32
    %c0_i32_1 = arith.constant 0 : i32
    return %c0_i32, %c0_i32_0 : i32, i32
  }
  func.func @transform_2(%arg0: i32) -> (i32, i32) {
    %c0_i32 = arith.constant 0 : i32
    %c0_i32_0 = arith.constant 0 : i32
    return %arg0, %c0_i32 : i32, i32
  }
}

</mosaic_0001>

<llo_original>
// kernel: tpu_custom_call.1
$region0: #{tpu_custom_call.1}
  #allocation0 [shape = 'u32[]', space=smem, size = 0x4, offset = 0x4, fixed_abs, tag = 'smem constant byte address 0x4 - core index']
  #allocation1 [shape = 'u32[72,128]{1,0:T(1,128)}', space=vmem, size = 0x9000, scoped, tag = 'internal scratch']
  %s0 = inlined_call_operand.hbm [shape: f32[8,128], index: 0, kind: input, shape index: {}]
  %s1 = inlined_call_operand.hbm [shape: f32[1,128], index: 1, kind: input, shape index: {}]
  %s2 = inlined_call_operand.hbm [shape: f32[8,128], index: 2, kind: output, shape index: {}]
  %s3 = sld [smem:[#allocation0]]
  $region26: #{tpu_custom_call.1} parent=0
    _
  %s5 = ssub.s32 1, %s3
  %s6 = scalar_select 0, %s5, %s3
  $region1: #{tpu_custom_call.1} parent=0
    #allocation2 [shape = 'u8[4096]{0}', space=vmem, size = 0x1000, scoped, tag = 'input window, operand 0, single buffered']
    #allocation3 [shape = 's32[1]{0}', space=sflag, size = 0x4, scoped, tag = 'scoped memory for tpu_custom_call.1']
    #allocation4 [shape = 's32[1]{0}', space=sflag, size = 0x4, scoped, tag = 'scoped memory for tpu_custom_call.1']
    #allocation5 [shape = 'u8[512]{0}', space=vmem, size = 0x400, scoped, tag = 'input window, operand 1, single buffered']
    #allocation6 [shape = 's32[1]{0}', space=sflag, size = 0x4, scoped, tag = 'scoped memory for tpu_custom_call.1']
    #allocation7 [shape = 'u8[4096]{0}', space=vmem, size = 0x1000, scoped, tag = 'output window, operand 0, single buffered']
    %7 = vsyncpa [#allocation3], 0
    %8 = vsyncpa [#allocation6], 0
    %9 = vsyncpa [#allocation4], 0
    // Predicated region
    $region2: #{tpu_custom_call.1} parent=1 // pred_check
      _
    $region3: #{tpu_custom_call.1} parent=1 // pred_check_branch
      %11 = sbr.rel (0) target = $region5
    $region4: #{tpu_custom_call.1} parent=1 // pred_region
      %13 = vsyncadd [#allocation3], 0
      %s15 = sshll.u32 %s0, 4
      %s16 = int_to_ptr.hbm [resolvable:$true] %s15
      %s17 = sshll.u32 [#allocation2], 4
      %s18 = int_to_ptr.vmem [resolvable:$true] %s17
      %20 = dma.hbm_to_vmem [thread:$0]  %s16, 128, %s18, [#allocation3]
    $region5: #{tpu_custom_call.1} parent=1 // pred_fallthru
      _
    // Predicated region
    $region6: #{tpu_custom_call.1} parent=1 // pred_check
      _
    $region7: #{tpu_custom_call.1} parent=1 // pred_check_branch
      %22 = sbr.rel (0) target = $region9
    $region8: #{tpu_custom_call.1} parent=1 // pred_region
      %24 = vsyncadd [#allocation6], 0
      %s26 = sshll.u32 %s1, 4
      %s27 = int_to_ptr.hbm [resolvable:$true] %s26
      %s28 = sshll.u32 [#allocation5], 4
      %s29 = int_to_ptr.vmem [resolvable:$true] %s28
      %31 = dma.hbm_to_vmem [thread:$0]  %s27, 16, %s29, [#allocation6]
    $region9: #{tpu_custom_call.1} parent=1 // pred_fallthru
      _
    // Predicated region
    $region10: #{tpu_custom_call.1} parent=1 // pred_check
      _
    $region11: #{tpu_custom_call.1} parent=1 // pred_check_branch
      %33 = sbr.rel (0) target = $region13
    $region12: #{tpu_custom_call.1} parent=1 // pred_region
      %35 = dma.done [#allocation3], 128
    $region13: #{tpu_custom_call.1} parent=1 // pred_fallthru
      _
    // Predicated region
    $region14: #{tpu_custom_call.1} parent=1 // pred_check
      _
    $region15: #{tpu_custom_call.1} parent=1 // pred_check_branch
      %37 = sbr.rel (0) target = $region17
    $region16: #{tpu_custom_call.1} parent=1 // pred_region
      %39 = dma.done [#allocation6], 16
    $region17: #{tpu_custom_call.1} parent=1 // pred_fallthru
      _
    %v40 = vld [vmem:[#allocation2] sm:$0xff]
    %v41 = vld [vmem:[#allocation5] sm:$0x1]
    %v43 = vperm.slane %v41, 0
    %v45 = vadd.f32 %v40, %v43
    %46 = vst [vmem:[#allocation7] sm:$0xff] %v45
    // Predicated region
    $region18: #{tpu_custom_call.1} parent=1 // pred_check
      _
    $region19: #{tpu_custom_call.1} parent=1 // pred_check_branch
      %48 = sbr.rel (0) target = $region21
    $region20: #{tpu_custom_call.1} parent=1 // pred_region
      %50 = vsyncadd [#allocation4], 0
      %s52 = sshll.u32 [#allocation7], 4
      %s53 = int_to_ptr.vmem [resolvable:$true] %s52
      %s54 = sshll.u32 %s2, 4
      %s55 = int_to_ptr.hbm [resolvable:$true] %s54
      %57 = dma.vmem_to_hbm [thread:$0]  %s53, 128, %s55, [#allocation4]
    $region21: #{tpu_custom_call.1} parent=1 // pred_fallthru
      _
    // Predicated region
    $region22: #{tpu_custom_call.1} parent=1 // pred_check
      _
    $region23: #{tpu_custom_call.1} parent=1 // pred_check_branch
      %59 = sbr.rel (0) target = $region25
    $region24: #{tpu_custom_call.1} parent=1 // pred_region
      %61 = dma.done [#allocation4], 128
    $region25: #{tpu_custom_call.1} parent=1 // pred_fallthru
      _
    %62 = vsyncpa [#allocation3], 1
    %63 = vsyncpa [#allocation6], 1
    %64 = vsyncpa [#allocation4], 1

</llo_original>
